<compile_context>
chip_gen: v7x
topology: tpu7x:2x2x1
jax: 0.10.0
libtpu: 0.0.40
codegen_flags: <defaults>
</compile_context>

<pallas_src>
import math

import jax
import jax.numpy as jnp
from jax.experimental import pallas as pl
from jax.experimental.pallas import tpu as pltpu


def _vdrop_kernel(x_ref, m_ref, o_ref):
    # x_ref: (bb, tt, hh); m_ref: (bb, 1, hh) -> broadcast over the seq axis.
    xf = x_ref[...].astype(jnp.float32)
    o_ref[...] = (xf * m_ref[...]).astype(o_ref.dtype)


def _vmem_budget():
    """(per-block byte target, scoped VMEM limit) tuned per TPU generation."""
    kind = ""
    try:
        kind = jax.devices()[0].device_kind.lower()
    except Exception:  # pragma: no cover - defensive, keep conservative tiles
        pass
    if "v7" in kind:
        # 3.2 TB/s HBM per TC: larger tiles amortize per-step overhead.
        # 6 MiB * 2 arrays * 2 buffers = 24 MiB, well under 64 MiB physical.
        return 6 * 1024 * 1024, 40 * 1024 * 1024
    if "v6" in kind:
        # 4 MiB * 2 * 2 = 16 MiB, under the 32 MiB default scoped limit.
        return 4 * 1024 * 1024, 32 * 1024 * 1024
    # v5e (16 MiB default scoped VMEM) and unknown chips: 2 MiB already
    # reaches ~85% of v5e's HBM roofline -- do not reuse v6e/v7x tuning.
    return 2 * 1024 * 1024, 16 * 1024 * 1024


def _largest_divisor(n, cap, step):
    """Largest d <= cap with n % d == 0 and d % step == 0, else None."""
    cap = min(cap, n)
    start = cap - (cap % step)
    for d in range(start, 0, -step):
        if n % d == 0:
            return d
    return None


# Sublane packing per dtype width (f32: 8, bf16: 16, int8/fp8: 32).
_SUBLANE = {4: 8, 2: 16, 1: 32}


def _pick_tiles(B, T, H, dtype, target_bytes):
    """Choose (bb, tt, hh) block dims for a lane-major (B, T, H) layout."""
    itemsize = jnp.dtype(dtype).itemsize
    sub = _SUBLANE.get(itemsize, 8)

    # Feature tile: normally the full (lane-dense) H; tile in multiples of
    # 128 only when even a minimal (sub, H) slab would blow the byte budget
    # (guards scoped/physical VMEM against very wide feature dims).
    hh = H
    if sub * H * itemsize > target_bytes and H > 128:
        budget = max(128, (target_bytes // (sub * itemsize)) // 128 * 128)
        hh = _largest_divisor(H, budget, 128) or budget

    # Sequence tile: multiple of the dtype's sublane packing; prefer a
    # divisor of T so no boundary block is a masked partial store.
    row_bytes = max(hh * itemsize, 1)
    tt = max(sub, (target_bytes // row_bytes) // sub * sub)
    tt = min(T, tt)
    if tt < T:
        tt = _largest_divisor(T, tt, sub) or tt

    # Batch tile: pack several batch elements per grid step only when the
    # whole (T, H) slab is small; cap bb so the grid keeps >= ~4 steps
    # (megacore sharding across v7x's two TCs + a next block to pipeline).
    bb = 1
    if tt == T and hh == H:
        bb = max(1, min(B, target_bytes // max(T * H * itemsize, 1)))
        bb = min(bb, max(1, B // 4))
        bb = _largest_divisor(B, bb, 1) or 1
    return bb, tt, hh


def _fold_lane_dense(x, mask, B, T, H):
    """Fold k seq steps into the feature axis so the last dim is lane-dense.

    (B, T, H) -> (B, T//k, k*H) with (k*H) % 128 == 0 and T % k == 0.
    The mask is tiled to (B, 1, k*H); element (b, j, s*H + h) of the folded
    array is x[b, j*k + s, h], whose mask is mask[b, 0, h] -- exactly the
    tiled value.  Returns (x_folded, mask_folded, k); k == 1 means no fold.
    """
    if H % 128 == 0:
        return x, mask, 1
    k0 = 128 // math.gcd(H, 128)
    k = 0
    for cand in range(k0, T + 1, k0):
        if T % cand == 0:
            k = cand
            break
    if k <= 1:
        # No divisor of T makes k*H lane-dense; fall back to masked stores.
        return x, mask, 1
    x_f = x.reshape(B, T // k, k * H)
    mask_f = jnp.tile(mask, (1, 1, k))
    return x_f, mask_f, k


def variational_dropout(x, dropout, key, *, training=True, donate_x=False):
    """JAX/Pallas equivalent of VariationalDropoutLayer.forward.

    x: (B, T, H).  In eval mode (or dropout == 0) returns x unchanged;
    otherwise multiplies by a Bernoulli(1 - dropout)/(1 - dropout) mask of
    shape (B, 1, H) shared across the sequence axis.  `dropout`/`training`
    must be static Python values.
    """
    if not training or dropout == 0.0:
        return x

    B, T, H = x.shape
    keep = 1.0 - float(dropout)

    # Per-(batch, feature) mask, pre-scaled by 1/keep, computed in f32.
    # TODO(synk): in-kernel mask generation via pltpu.prng_* is TPU-only (no
    # interpret/CPU lowering) and would serialize the grid, so the tiny mask
    # is generated in the wrapper instead.
    mask = (
        jax.random.bernoulli(key, keep, (B, 1, H)).astype(jnp.float32)
        / jnp.float32(keep)
    )

    # Lane-dense fold when H is not a multiple of 128 (biggest perf lever).
    x_k, mask_k, k = _fold_lane_dense(x, mask, B, T, H)
    _, T_k, H_k = x_k.shape

    target_bytes, vmem_limit = _vmem_budget()
    bb, tt, hh = _pick_tiles(B, T_k, H_k, x.dtype, target_bytes)
    grid = (pl.cdiv(B, bb), pl.cdiv(T_k, tt), pl.cdiv(H_k, hh))

    itemsize = jnp.dtype(x.dtype).itemsize
    cost = pl.CostEstimate(
        flops=x.size,
        transcendentals=0,
        bytes_accessed=2 * x.size * itemsize + mask_k.size * 4,
    )

    out = pl.pallas_call(
        _vdrop_kernel,
        out_shape=jax.ShapeDtypeStruct(x_k.shape, x.dtype),
        grid=grid,
        in_specs=[
            # Data tile: batch outer, seq middle, feature inner.
            pl.BlockSpec((bb, tt, hh), lambda i, j, h: (i, j, h)),
            # Mask tile: constant over the seq axis -> DMA'd once per batch
            # tile, never re-fetched as j advances.
            pl.BlockSpec((bb, 1, hh), lambda i, j, h: (i, 0, h)),
        ],
        out_specs=pl.BlockSpec((bb, tt, hh), lambda i, j, h: (i, j, h)),
        compiler_params=pltpu.CompilerParams(
            # All grid axes write independent output blocks -> parallel, so
            # Mosaic can shard steps across v7x's two TensorCores.
            dimension_semantics=("parallel", "parallel", "parallel"),
            vmem_limit_bytes=vmem_limit,
        ),
        cost_estimate=cost,
        # Only alias when the caller guarantees x is dead after this op
        # (dropout's VJP needs only the mask, not x).
        input_output_aliases=({0: 0} if donate_x else {}),
    )(x_k, mask_k)

    if k > 1:
        out = out.reshape(B, T, H)
    return out


if __name__ == "__main__":
    B, T, H = 2, 8, 32
    dropout = 0.25

    key = jax.random.PRNGKey(0)
    xkey, mkey = jax.random.split(key)
    x = jax.random.normal(xkey, (B, T, H), dtype=jnp.float32)

    out = variational_dropout(x, dropout, mkey, training=True)
    out = jax.block_until_ready(out)

    # Correctness checks:
    #  - eval mode is identity
    out_eval = variational_dropout(x, dropout, mkey, training=False)
    assert jnp.array_equal(out_eval, x)
    #  - exact match against a pure-JAX reference using the same mask
    keep = 1.0 - dropout
    mask_ref = jax.random.bernoulli(mkey, keep, (B, 1, H)).astype(jnp.float32) / keep
    expected = x * mask_ref
    assert jnp.allclose(out, expected, atol=1e-6, rtol=1e-6)
    #  - every output element is either 0 or x / (1 - p)
    inv = 1.0 / keep
    ratio = jnp.where(x != 0, out / x, 0.0)
    ok = jnp.all((jnp.abs(ratio) < 1e-5) | (jnp.abs(ratio - inv) < 1e-4))
    assert bool(ok)
    #  - mask is shared across the sequence axis for each (batch, feature)
    same_over_t = jnp.all(jnp.abs(ratio - ratio[:, :1, :]) < 1e-4)
    assert bool(same_over_t)

    print("KERNEL_OK")
</pallas_src>

<mosaic_0001>
module attributes {stable_mosaic.version = 11 : i64} {
  func.func @_vdrop_kernel(%arg0: i32, %arg1: i32, %arg2: i32, %arg3: memref<1x2x128xf32, #tpu.memory_space<vmem>>, %arg4: memref<1x1x128xf32, #tpu.memory_space<vmem>>, %arg5: memref<1x2x128xf32, #tpu.memory_space<vmem>>) attributes {dimension_semantics = [#tpu.dimension_semantics<parallel>, #tpu.dimension_semantics<parallel>, #tpu.dimension_semantics<parallel>], iteration_bounds = array<i64: 2, 1, 1>, scalar_prefetch = 0 : i64, scratch_operands = 0 : i64, tpu.core_type = #tpu.core_type<tc>, window_params = [{transform_indices = @transform_0, window_bounds = array<i64: 1, 2, 128>}, {transform_indices = @transform_1, window_bounds = array<i64: 1, 1, 128>}, {transform_indices = @transform_2, window_bounds = array<i64: 1, 2, 128>}]} {
    %c0 = arith.constant 0 : index
    %c0_0 = arith.constant 0 : index
    %c0_1 = arith.constant 0 : index
    %0 = vector.load %arg3[%c0, %c0_0, %c0_1] : memref<1x2x128xf32, #tpu.memory_space<vmem>>, vector<1x2x128xf32>
    %c0_2 = arith.constant 0 : index
    %c0_3 = arith.constant 0 : index
    %c0_4 = arith.constant 0 : index
    %1 = vector.load %arg4[%c0_2, %c0_3, %c0_4] : memref<1x1x128xf32, #tpu.memory_space<vmem>>, vector<1x1x128xf32>
    %2 = vector.broadcast %1 : vector<1x1x128xf32> to vector<1x2x128xf32>
    %3 = arith.mulf %0, %2 : vector<1x2x128xf32>
    %c0_5 = arith.constant 0 : index
    %c0_6 = arith.constant 0 : index
    %c0_7 = arith.constant 0 : index
    %4 = vector.load %arg5[%c0_5, %c0_6, %c0_7] : memref<1x2x128xf32, #tpu.memory_space<vmem>>, vector<1x2x128xf32>
    tpu.vector_store %arg5[%c0_5, %c0_6, %c0_7], %3 {strides = array<i32>} : memref<1x2x128xf32, #tpu.memory_space<vmem>>, vector<1x2x128xf32>,
    return
  }
  func.func @transform_0(%arg0: i32, %arg1: i32, %arg2: i32) -> (i32, i32, i32) {
    %c0_i32 = arith.constant 0 : i32
    return %arg0, %arg1, %arg2 : i32, i32, i32
  }
  func.func @transform_1(%arg0: i32, %arg1: i32, %arg2: i32) -> (i32, i32, i32) {
    %c0_i32 = arith.constant 0 : i32
    %c0_i32_0 = arith.constant 0 : i32
    return %arg0, %c0_i32, %arg2 : i32, i32, i32
  }
  func.func @transform_2(%arg0: i32, %arg1: i32, %arg2: i32) -> (i32, i32, i32) {
    %c0_i32 = arith.constant 0 : i32
    return %arg0, %arg1, %arg2 : i32, i32, i32
  }
}

</mosaic_0001>

<llo_original>
// kernel: tpu_custom_call.1
$region0: #{tpu_custom_call.1}
  #allocation0 [shape = 'u32[]', space=smem, size = 0x4, offset = 0x4, fixed_abs, tag = 'smem constant byte address 0x4 - core index']
  #allocation1 [shape = 'u32[144,128]{1,0:T(1,128)}', space=vmem, size = 0x12000, scoped, tag = 'internal scratch']
  %s0 = inlined_call_operand.hbm [shape: f32[2,2,128], index: 0, kind: input, shape index: {}]
  %s1 = inlined_call_operand.vmem [shape: f32[2,1,128], index: 1, kind: input, shape index: {}]
  %s2 = inlined_call_operand.hbm [shape: f32[2,2,128], index: 2, kind: output, shape index: {}]
  %s3 = sld [smem:[#allocation0]]
  $region45: #{tpu_custom_call.1} parent=0
    _
  %s5 = ssub.s32 1, %s3
  %s6 = scalar_select 0, %s5, %s3
  $region1: #{tpu_custom_call.1} parent=0
    #allocation2 [shape = 'u8[2048]{0}', space=vmem, size = 0x800, scoped, tag = 'input window, operand 0']
    #allocation3 [shape = 's32[2]{0}', space=sflag, size = 0x8, scoped, tag = 'scoped memory for tpu_custom_call.1']
    #allocation4 [shape = 's32[2]{0}', space=sflag, size = 0x8, scoped, tag = 'scoped memory for tpu_custom_call.1']
    #allocation5 [shape = 'u8[2048]{0}', space=vmem, size = 0x800, scoped, tag = 'output window, operand 0']
    %7 = vsyncpa [#allocation3], 0
    %s8 = scalar_lea.sflag [#allocation3], 1
    %9 = vsyncpa %s8, 0
    %10 = vsyncpa [#allocation4], 0
    %s11 = scalar_lea.sflag [#allocation4], 1
    %12 = vsyncpa %s11, 0
    loop: start=0, step=1, limit=4
    $region2: #{tpu_custom_call.1} parent=1 // loop_pre_header
      _
    $region3: #{tpu_custom_call.1} parent=1 // loop_header
      %s14 = sphi 0, %s18
      %p15 = scmp.ge.s32.totalorder %s14, 4
      %s21 = sphi 0, %s40
      %s22 = sphi 0, %s36
      %s23 = sphi 0, %s32
      %s24 = sphi 0, %s21
      %s25 = sphi 0, %s22
      %s26 = sphi 0, %s23
      %s27 = sphi 0, %s24
      %s28 = sphi 0, %s25
      %s29 = sphi 0, %s26
      %s47 = sphi 0, %s49
      %s50 = sphi 0, %s47
      %s51 = sphi 0, %s50
      %s67 = sphi 0, %s51
      %s75 = sphi 0, %s77
      %s78 = sphi 0, %s75
      %s79 = sphi 0, %s78
      %s95 = sphi 0, %s79
      %s105 = sphi 0, %s107
      %s108 = sphi 0, %s105
      %s109 = sphi 0, %s108
      %s125 = sphi 0, %s109
    $region4: #{tpu_custom_call.1} parent=1 // loop_header_branch
      %17 = sbr.rel (%p15) target = $region8
    $region5: #{tpu_custom_call.1} parent=1 // loop_body
      %s19 = ssub.s32 %s14, 1
      %s20 = ssub.s32 %s14, 2
      %s30 = sadd.s32 1, %s23
      %p31 = scmp.ge.s32.totalorder %s30, 1
      %s32 = scalar_select %p31, 0, %s30
      %s33 = sadd.s32 1, %s22
      %s34 = scalar_select %p31, %s33, %s22
      %p35 = scmp.ge.s32.totalorder %s34, 1
      %s36 = scalar_select %p35, 0, %s34
      %s37 = sadd.s32 1, %s21
      %s38 = scalar_select %p35, %s37, %s21
      %p39 = scmp.ge.s32.totalorder %s38, 2
      %s40 = scalar_select %p39, 0, %s38
      %s41 = ssub.s32 %s21, %s40
      %s42 = ssub.s32 %s22, %s36
      %s43 = sor.u32 %s41, %s42
      %s44 = ssub.s32 %s23, %s32
      %s45 = sor.u32 %s43, %s44
      %p46 = scmp.eq.s32.totalorder %s45, 0
      %s48 = sadd.s32 %s47, 1
      %s49 = scalar_select %p46, %s47, %s48
      %p52 = pneg %p46
      %p53 = scmp.eq.s32.totalorder %s14, 1
      %p54 = por %p52, %p53
      %p55 = scmp.ne.s32.totalorder %s47, %s50
      %p56 = scmp.eq.s32.totalorder %s14, 0
      %p57 = por %p55, %p56
      %p58 = scmp.ne.s32.totalorder %s47, %s50
      %p59 = scmp.eq.s32.totalorder %s19, 1
      %p60 = por %p58, %p59
      %p61 = scmp.ne.s32.totalorder %s50, %s51
      %p62 = scmp.eq.s32.totalorder %s19, 0
      %p63 = por %p61, %p62
      %p64 = scmp.ne.s32.totalorder %s50, %s51
      %p65 = scmp.eq.s32.totalorder %s20, 1
      %p66 = por %p64, %p65
      %p68 = scmp.ne.s32.totalorder %s51, %s67
      %p69 = scmp.eq.s32.totalorder %s20, 0
      %p70 = por %p68, %p69
      %s71 = ssub.s32 %s21, %s40
      %s72 = ssub.s32 %s23, %s32
      %s73 = sor.u32 %s71, %s72
      %p74 = scmp.eq.s32.totalorder %s73, 0
      %s76 = sadd.s32 %s75, 1
      %s77 = scalar_select %p74, %s75, %s76
      %p80 = pneg %p74
      %p81 = scmp.eq.s32.totalorder %s14, 1
      %p82 = por %p80, %p81
      %p83 = scmp.ne.s32.totalorder %s75, %s78
      %p84 = scmp.eq.s32.totalorder %s14, 0
      %p85 = por %p83, %p84
      %p86 = scmp.ne.s32.totalorder %s75, %s78
      %p87 = scmp.eq.s32.totalorder %s19, 1
      %p88 = por %p86, %p87
      %p89 = scmp.ne.s32.totalorder %s78, %s79
      %p90 = scmp.eq.s32.totalorder %s19, 0
      %p91 = por %p89, %p90
      %p92 = scmp.ne.s32.totalorder %s78, %s79
      %p93 = scmp.eq.s32.totalorder %s20, 1
      %p94 = por %p92, %p93
      %p96 = scmp.ne.s32.totalorder %s79, %s95
      %p97 = scmp.eq.s32.totalorder %s20, 0
      %p98 = por %p96, %p97
      %s99 = ssub.s32 %s21, %s40
      %s100 = ssub.s32 %s22, %s36
      %s101 = sor.u32 %s99, %s100
      %s102 = ssub.s32 %s23, %s32
      %s103 = sor.u32 %s101, %s102
      %p104 = scmp.eq.s32.totalorder %s103, 0
      %s106 = sadd.s32 %s105, 1
      %s107 = scalar_select %p104, %s105, %s106
      %p110 = pneg %p104
      %p111 = scmp.eq.s32.totalorder %s14, 1
      %p112 = por %p110, %p111
      %p113 = scmp.ne.s32.totalorder %s105, %s108
      %p114 = scmp.eq.s32.totalorder %s14, 0
      %p115 = por %p113, %p114
      %p116 = scmp.ne.s32.totalorder %s105, %s108
      %p117 = scmp.eq.s32.totalorder %s19, 1
      %p118 = por %p116, %p117
      %p119 = scmp.ne.s32.totalorder %s108, %s109
      %p120 = scmp.eq.s32.totalorder %s19, 0
      %p121 = por %p119, %p120
      %p122 = scmp.ne.s32.totalorder %s108, %s109
      %p123 = scmp.eq.s32.totalorder %s20, 1
      %p124 = por %p122, %p123
      %p126 = scmp.ne.s32.totalorder %s109, %s125
      %p127 = scmp.eq.s32.totalorder %s20, 0
      %p128 = por %p126, %p127
      %p129 = scmp.le.s32.totalorder 1, %s14
      %p130 = scmp.lt.s32.totalorder %s14, 3
      %p131 = pnand %p129, %p130
      %p132 = pneg %p131
      // Predicated region
      $region9: #{tpu_custom_call.1} parent=5 // pred_check
        _
      $region10: #{tpu_custom_call.1} parent=5 // pred_check_branch
        %134 = sbr.rel (%p131) target = $region12
      $region11: #{tpu_custom_call.1} parent=5 // pred_region
        %s135 = ssub.s32 %s14, 1
      $region12: #{tpu_custom_call.1} parent=5 // pred_fallthru
        _
      %p136 = scmp.lt.s32.totalorder %s14, 2
      // Predicated region
      $region13: #{tpu_custom_call.1} parent=5 // pred_check
        %p137 = pneg %p136
      $region14: #{tpu_custom_call.1} parent=5 // pred_check_branch
        %139 = sbr.rel (%p137) target = $region16
      $region15: #{tpu_custom_call.1} parent=5 // pred_region
        // Predicated region
        $region17: #{tpu_custom_call.1} parent=15 // pred_check
          %p140 = pneg %p57
        $region18: #{tpu_custom_call.1} parent=15 // pred_check_branch
          %142 = sbr.rel (%p140) target = $region20
        $region19: #{tpu_custom_call.1} parent=15 // pred_region
          %s143 = sand.u32 %s47, 1
          %s144 = scalar_lea.sflag [#allocation3], %s143
          %s145 = sand.u32 %s47, 1
          %s146 = smul.addr %s145, 2
          %s147 = scalar_lea.vmem [#allocation2], %s146
          %s149 = ssub.s32 32, 32
          %150 = vsyncadd %s144, %s149
          %s151 = sadd.s32 %s23, %s22
          %s152 = sadd.s32 %s151, %s21
          %s153 = smul.addr %s152, 32
          %s154 = scalar_lea.hbm %s0, %s153
          %s156 = sshll.u32 %s147, 4
          %s157 = int_to_ptr.vmem [resolvable:$true] %s156
          %159 = dma.hbm_to_vmem [thread:$0]  %s154, 32, %s157, %s144
        $region20: #{tpu_custom_call.1} parent=15 // pred_fallthru
          _
        // Predicated region
        $region21: #{tpu_custom_call.1} parent=15 // pred_check
          %p160 = pneg %p85
        $region22: #{tpu_custom_call.1} parent=15 // pred_check_branch
          %162 = sbr.rel (%p160) target = $region24
        $region23: #{tpu_custom_call.1} parent=15 // pred_region
          %p163 = scmp.lt.s32.totalorder %s21, 1
          %s164 = scalar_select %p163, %s21, 1
          %p165 = scmp.lt.s32.totalorder %s23, 0
          %s166 = scalar_select %p165, %s23, 0
          %s167 = sadd.s32 %s166, %s164
          %s168 = scalar_lea.vmem %s1, %s167
        $region24: #{tpu_custom_call.1} parent=15 // pred_fallthru
          _
      $region16: #{tpu_custom_call.1} parent=5 // pred_fallthru
        _
      %p169 = scmp.le.s32.totalorder 1, %s14
      %p170 = scmp.lt.s32.totalorder %s14, 3
      %p171 = pnand %p169, %p170
      %p172 = pneg %p171
      // Predicated region
      $region25: #{tpu_custom_call.1} parent=5 // pred_check
        _
      $region26: #{tpu_custom_call.1} parent=5 // pred_check_branch
        %174 = sbr.rel (%p171) target = $region28
      $region27: #{tpu_custom_call.1} parent=5 // pred_region
        %s175 = ssub.s32 %s14, 1
        %s176 = sand.u32 %s50, 1
        %s177 = scalar_lea.sflag [#allocation3], %s176
        %s178 = sand.u32 %s50, 1
        %s179 = smul.addr %s178, 2
        %s180 = scalar_lea.vmem [#allocation2], %s179
        // Predicated region
        $region29: #{tpu_custom_call.1} parent=27 // pred_check
          %p181 = pneg %p63
        $region30: #{tpu_custom_call.1} parent=27 // pred_check_branch
          %183 = sbr.rel (%p181) target = $region32
        $region31: #{tpu_custom_call.1} parent=27 // pred_region
          %184 = dma.done %s177, 32
        $region32: #{tpu_custom_call.1} parent=27 // pred_fallthru
          _
        %s185 = sand.u32 %s50, 1
        %s186 = scalar_lea.sflag [#allocation3], %s185
        %s187 = sand.u32 %s50, 1
        %s188 = smul.addr %s187, 2
        %s189 = scalar_lea.vmem [#allocation2], %s188
        %p190 = pneg %p63
        %p191 = pneg %p60
        %p192 = scmp.lt.s32.totalorder %s24, 1
        %s193 = scalar_select %p192, %s24, 1
        %p194 = scmp.lt.s32.totalorder %s26, 0
        %s195 = scalar_select %p194, %s26, 0
        %s196 = sadd.s32 %s195, %s193
        %s197 = scalar_lea.vmem %s1, %s196
        %p198 = pneg %p91
        %p199 = pneg %p88
        %p200 = pneg %p121
        %p201 = pneg %p118
        %s202 = sand.u32 %s108, 1
        %s203 = scalar_lea.sflag [#allocation4], %s202
        %s204 = sand.u32 %s108, 1
        %s205 = smul.addr %s204, 2
        %s206 = scalar_lea.vmem [#allocation5], %s205
        %p207 = scmp.lt.s32.totalorder %s24, 1
        %s208 = scalar_select %p207, %s24, 1
        %p209 = scmp.lt.s32.totalorder %s26, 0
        %s210 = scalar_select %p209, %s26, 0
        %s211 = sadd.s32 %s210, %s208
        %s212 = scalar_lea.vmem %s1, %s211
        %v213 = vld [vmem:[%s180] sm:$0x3]
        %v214 = vld [vmem:[%s212] sm:$0x1]
        %v216 = vlaneseq
        %v217 = vshrl.u32 %v216, 7
        %v218 = vsub.s32 0, %v217
        %v219 = vrot.slane %v214, %v218
        %v221 = vmul.f32 %v213, %v219
        %222 = vst [vmem:[%s206] sm:$0x3] %v221
        %s223 = sand.u32 %s108, 1
        %s224 = scalar_lea.sflag [#allocation4], %s223
        %s225 = sand.u32 %s108, 1
        %s226 = smul.addr %s225, 2
        %s227 = scalar_lea.vmem [#allocation5], %s226
        // Predicated region
        $region33: #{tpu_custom_call.1} parent=27 // pred_check
          %p228 = pneg %p118
        $region34: #{tpu_custom_call.1} parent=27 // pred_check_branch
          %230 = sbr.rel (%p228) target = $region36
        $region35: #{tpu_custom_call.1} parent=27 // pred_region
          %s232 = ssub.s32 32, 32
          %233 = vsyncadd %s224, %s232
          %s234 = sadd.s32 %s26, %s25
          %s235 = sadd.s32 %s234, %s24
          %s236 = smul.addr %s235, 32
          %s237 = scalar_lea.hbm %s2, %s236
          %s239 = sshll.u32 %s227, 4
          %s240 = int_to_ptr.vmem [resolvable:$true] %s239
          %242 = dma.vmem_to_hbm [thread:$0]  %s240, 32, %s237, %s224
        $region36: #{tpu_custom_call.1} parent=27 // pred_fallthru
          _
      $region28: #{tpu_custom_call.1} parent=5 // pred_fallthru
        _
      %p243 = scmp.le.s32.totalorder 2, %s14
      // Predicated region
      $region37: #{tpu_custom_call.1} parent=5 // pred_check
        %p244 = pneg %p243
      $region38: #{tpu_custom_call.1} parent=5 // pred_check_branch
        %246 = sbr.rel (%p244) target = $region40
      $region39: #{tpu_custom_call.1} parent=5 // pred_region
        %s247 = ssub.s32 %s14, 2
        // Predicated region
        $region41: #{tpu_custom_call.1} parent=39 // pred_check
          %p248 = pneg %p124
        $region42: #{tpu_custom_call.1} parent=39 // pred_check_branch
          %250 = sbr.rel (%p248) target = $region44
        $region43: #{tpu_custom_call.1} parent=39 // pred_region
          %s251 = sand.u32 %s109, 1
          %s252 = scalar_lea.sflag [#allocation4], %s251
          %s253 = sand.u32 %s109, 1
          %s254 = smul.addr %s253, 2
          %s255 = scalar_lea.vmem [#allocation5], %s254
          %256 = dma.done %s252, 32
        $region44: #{tpu_custom_call.1} parent=39 // pred_fallthru
          _
      $region40: #{tpu_custom_call.1} parent=5 // pred_fallthru
        _
    $region6: #{tpu_custom_call.1} parent=1 // loop_footer
      %s18 = sadd.s32 1, %s14
    $region7: #{tpu_custom_call.1} parent=1 // loop_footer_branch
      %13 = sbr.rel target = $region3
    $region8: #{tpu_custom_call.1} parent=1 // loop_exit
      _
    %257 = vsyncpa [#allocation3], 1
    %s258 = scalar_lea.sflag [#allocation3], 1
    %259 = vsyncpa %s258, 1
    %260 = vsyncpa [#allocation4], 1
    %s261 = scalar_lea.sflag [#allocation4], 1
    %262 = vsyncpa %s261, 1

</llo_original>
